<compile_context>
chip_gen: v6e
topology: v6e:2x2x1
jax: 0.10.0
libtpu: 0.0.40
codegen_flags: <defaults>
</compile_context>

<pallas_src>
import functools

import jax
import jax.numpy as jnp
from jax import lax
from jax.experimental import pallas as pl
from jax.experimental.pallas import tpu as pltpu


# ---------------------------------------------------------------------------
# Kernel 1: full-vocabulary q-model logits  (q_model.calculate_logits)
# ---------------------------------------------------------------------------
def _logits_kernel(h_ref, e_ref, o_ref):
    # h_ref: [B, D] bf16 (resident), e_ref: [TN, D] bf16 tile of the table.
    # Contract on the last dim of both operands -> no host-side E transpose.
    o_ref[...] = lax.dot_general(
        h_ref[...], e_ref[...],
        dimension_numbers=(((1,), (1,)), ((), ())),
        preferred_element_type=jnp.float32)


def compute_logits(h, emb_table, *, tn_target=512):
    """h: [B, D], emb_table: [N, D]  ->  logits [B, N] f32, tiled over N."""
    B, D = h.shape
    N = emb_table.shape[0]

    # Vocab tile: largest of {tn_target, 256, 128} that divides N, else one
    # full block.  Lane-dense (multiple of 128) output stores.
    tn = N
    for cand in (tn_target, 256, 128):
        if cand <= N and N % cand == 0:
            tn = cand
            break
    grid = (N // tn,)

    # bf16 halves HBM bytes of the dominant E stream and uses the bf16-native
    # MXU on v5e/v6e/v7x; accumulation stays f32 via preferred_element_type.
    h_bf = h.astype(jnp.bfloat16)
    e_bf = emb_table.astype(jnp.bfloat16)

    # Double-buffered E tile + double-buffered output tile + resident h,
    # with slack; capped at 48 MiB so it is valid on v7x's 64 MiB VMEM while
    # still above the 16/32 MiB scoped defaults of v5e/v6e.
    vmem_est = 2 * (tn * D * 2) + 2 * (B * tn * 4) + B * D * 2
    vmem_limit = int(min(max(4 * vmem_est, 32 * 2**20), 48 * 2**20))

    return pl.pallas_call(
        _logits_kernel,
        out_shape=jax.ShapeDtypeStruct((B, N), jnp.float32),
        grid_spec=pltpu.PrefetchScalarGridSpec(
            num_scalar_prefetch=0,
            grid=grid,
            in_specs=[
                pl.BlockSpec((B, D), lambda j: (0, 0)),    # h stays resident
                pl.BlockSpec((tn, D), lambda j: (j, 0)),   # stream E tiles
            ],
            out_specs=pl.BlockSpec((B, tn), lambda j: (0, j)),
        ),
        compiler_params=pltpu.CompilerParams(
            dimension_semantics=("parallel",),   # independent logit tiles
            vmem_limit_bytes=vmem_limit,
        ),
    )(h_bf, e_bf)


# ---------------------------------------------------------------------------
# Kernel 2: candidate gather + scoring + NCE loss (f32 math, v5e-friendly)
# ---------------------------------------------------------------------------
def _nce_loss_kernel(idx_ref, hp_ref, nlg_ref, ep_ref, o_ref,
                     emb_sc, sems, *, B, Kp1, K):
    # idx_ref : [B, K+1] int32 SMEM (scalar prefetch)  candidate item ids
    # hp_ref  : [B, D]   f32 VMEM                      p-model hidden state
    # nlg_ref : [B, K+1] f32 VMEM                      gathered q-model logits
    # ep_ref  : [N, D]   f32 HBM (pl.ANY)              p-model item table
    # emb_sc  : [B, K+1, D] f32 VMEM scratch           gathered p embeddings
    # sems    : DMA semaphores (2, K+1), double-buffered per batch row

    def _copies(b):
        slot = b % 2
        return [
            pltpu.make_async_copy(
                ep_ref.at[pl.ds(idx_ref[b, c], 1)],   # one [1, D] row of E_p
                emb_sc.at[b, c:c + 1],                # matching [1, D] slot
                sems.at[slot, c],
            )
            for c in range(Kp1)
        ]

    def _start_row(b):
        for cp in _copies(b):
            cp.start()

    def _wait_row(b):
        for cp in _copies(b):
            cp.wait()

    # In-kernel gather HBM -> VMEM with one-row lookahead (overlap DMA with
    # the waits of the previous row).
    # TODO(synk): for production B*(K+1), pipeline the gather against the
    #             per-row compute instead of gathering everything up front.
    _start_row(0)
    for b in range(B):
        if b + 1 < B:
            _start_row(b + 1)
        _wait_row(b)

    hp = hp_ref[...]                           # [B, D]
    emb = emb_sc[...]                          # [B, K+1, D]  (D lane-dense)
    noise_logits = nlg_ref[...]                # [B, K+1]

    # p_model.calculate_logits_given_items: per-candidate dot over D (lanes).
    actual_logits = jnp.sum(emb * hp[:, None, :], axis=-1)      # [B, K+1]

    def _softmax(x):
        m = jnp.max(x, axis=-1, keepdims=True)
        e = jnp.exp(x - m)
        return e * pl.reciprocal(jnp.sum(e, axis=-1, keepdims=True),
                                 approx=True)

    noise_prob = _softmax(noise_logits)
    actual_prob = _softmax(actual_logits)

    inv_deno = pl.reciprocal(K * noise_prob + actual_prob + 1e-6, approx=True)
    tmp1 = actual_prob * inv_deno
    tmp2 = noise_prob * inv_deno

    # likeli = cat(tmp1[:, :1], tmp2[:, 1:])
    col = lax.broadcasted_iota(jnp.int32, tmp1.shape, 1)
    likeli = jnp.where(col == 0, tmp1, tmp2)

    loss = -jnp.mean(jnp.log(likeli))
    o_ref[...] = jnp.reshape(loss, (1, 1))


def nce_loss(pos_neg_items, h_p, noise_gathered_logits, emb_table_p, K):
    B, Kp1 = pos_neg_items.shape
    D = h_p.shape[1]
    kernel = functools.partial(_nce_loss_kernel, B=B, Kp1=Kp1, K=K)
    out = pl.pallas_call(
        kernel,
        out_shape=jax.ShapeDtypeStruct((1, 1), jnp.float32),
        grid_spec=pltpu.PrefetchScalarGridSpec(
            num_scalar_prefetch=1,                  # pos_neg_items -> SMEM
            grid=(1,),
            in_specs=[
                pl.BlockSpec((B, D), lambda i, idx: (0, 0)),
                pl.BlockSpec((B, Kp1), lambda i, idx: (0, 0)),
                pl.BlockSpec(memory_space=pl.ANY),  # E_p stays in HBM
            ],
            out_specs=pl.BlockSpec((1, 1), lambda i, idx: (0, 0)),
            scratch_shapes=[
                pltpu.VMEM((B, Kp1, D), jnp.float32),
                pltpu.SemaphoreType.DMA((2, Kp1)),
            ],
        ),
        compiler_params=pltpu.CompilerParams(
            dimension_semantics=("arbitrary",),
        ),
    )(pos_neg_items, h_p, noise_gathered_logits, emb_table_p)
    return out[0, 0]


# ---------------------------------------------------------------------------
# Surrogate sequence encoder (stands in for p_model / q_model internals)
# TODO(synk): the real p_model/q_model architectures are external to this
#             module; a deterministic mean-embedding encoder is used instead.
# ---------------------------------------------------------------------------
def encode(emb_table, w_time, item_seq, item_seq_len,
           time_seq, time_interval_seq, target_time):
    seq_emb = emb_table[item_seq]                               # [B, S, D]
    S = item_seq.shape[1]
    mask = (jnp.arange(S)[None, :] < item_seq_len[:, None]).astype(jnp.float32)
    denom = jnp.maximum(item_seq_len, 1).astype(jnp.float32)    # zero-len guard
    h = jnp.sum(seq_emb * mask[..., None], axis=1) / denom[:, None]
    time_feat = jnp.stack(
        [time_seq.mean(axis=1), time_interval_seq.mean(axis=1), target_time],
        axis=1)                                                 # [B, 3]
    return h + jnp.tanh(time_feat @ w_time)                     # [B, D]


# ---------------------------------------------------------------------------
# AdverNCE forward
# ---------------------------------------------------------------------------
def adver_nce_forward(params, K, rng, item_seq, item_seq_len, target_id,
                      time_seq, time_interval_seq, target_time):
    B = item_seq.shape[0]

    # --- q_model.calculate_logits (tiled Pallas MXU kernel) ---
    h_q = encode(params["E_q"], params["W_t_q"], item_seq, item_seq_len,
                 time_seq, time_interval_seq, target_time)
    noise_logits = compute_logits(h_q, params["E_q"])            # [B, N] f32

    # --- multinomial(softmax(noise_logits) * one_hot, K, no replacement) ---
    # Gumbel top-K: top_k is invariant to the per-row log_softmax shift, so
    # sample straight from the target-masked raw logits (no extra [B,N] scan).
    masked = noise_logits.at[jnp.arange(B), target_id].set(-jnp.inf)
    gumbel = jax.random.gumbel(rng, masked.shape, dtype=jnp.float32)
    _, neg_items = lax.top_k(masked + gumbel, K)                 # [B, K]
    pos_neg_items = jnp.concatenate(
        [target_id[:, None], neg_items], axis=1).astype(jnp.int32)

    # Gathered q logits at the K+1 candidates (tiny [B, K+1]).  At vocab scale
    # this could be recomputed inside kernel 2 from gathered E_q rows to avoid
    # one more full read of the [B, N] slab.
    noise_gathered = jnp.take_along_axis(noise_logits, pos_neg_items, axis=1)

    # --- p_model hidden state + fused gather / scoring / NCE loss kernel ---
    h_p = encode(params["E_p"], params["W_t_p"], item_seq, item_seq_len,
                 time_seq, time_interval_seq, target_time)
    return nce_loss(pos_neg_items, h_p, noise_gathered, params["E_p"], K)


# ---------------------------------------------------------------------------
if __name__ == "__main__":
    B, S, D, N_ITEMS, K = 8, 8, 32, 1024, 8

    key = jax.random.PRNGKey(0)
    k_eq, k_ep, k_tq, k_tp, k_seq, k_len, k_tgt, k_time, k_samp = \
        jax.random.split(key, 9)

    params = {
        "E_q": jax.random.normal(k_eq, (N_ITEMS, D), jnp.float32) * 0.1,
        "E_p": jax.random.normal(k_ep, (N_ITEMS, D), jnp.float32) * 0.1,
        "W_t_q": jax.random.normal(k_tq, (3, D), jnp.float32) * 0.1,
        "W_t_p": jax.random.normal(k_tp, (3, D), jnp.float32) * 0.1,
    }

    item_seq = jax.random.randint(k_seq, (B, S), 1, N_ITEMS, jnp.int32)
    item_seq_len = jax.random.randint(k_len, (B,), 1, S + 1, jnp.int32)
    target_id = jax.random.randint(k_tgt, (B,), 0, N_ITEMS, jnp.int32)
    time_seq = jax.random.uniform(k_time, (B, S), jnp.float32)
    time_interval_seq = jnp.diff(time_seq, axis=1, prepend=0.0)
    target_time = time_seq[:, -1] + 0.1

    loss = adver_nce_forward(params, K, k_samp, item_seq, item_seq_len,
                             target_id, time_seq, time_interval_seq,
                             target_time)
    loss = jax.block_until_ready(loss)
    assert jnp.isfinite(loss), "loss is not finite"
    print("KERNEL_OK")
</pallas_src>

<mosaic_0001>
module attributes {stable_mosaic.version = 11 : i64} {
  func.func @_logits_kernel(%arg0: i32, %arg1: memref<8x32xbf16, #tpu.memory_space<vmem>>, %arg2: memref<512x32xbf16, #tpu.memory_space<vmem>>, %arg3: memref<8x512xf32, #tpu.memory_space<vmem>>) attributes {dimension_semantics = [#tpu.dimension_semantics<parallel>], iteration_bounds = array<i64: 2>, scalar_prefetch = 0 : i64, scratch_operands = 0 : i64, tpu.core_type = #tpu.core_type<tc>, window_params = [{pipeline_mode = #tpu.pipeline_mode<synchronous>, transform_indices = @transform_0, window_bounds = array<i64: 8, 32>}, {transform_indices = @transform_1, window_bounds = array<i64: 512, 32>}, {transform_indices = @transform_2, window_bounds = array<i64: 8, 512>}]} {
    %c0 = arith.constant 0 : index
    %c0_0 = arith.constant 0 : index
    %0 = vector.load %arg1[%c0, %c0_0] : memref<8x32xbf16, #tpu.memory_space<vmem>>, vector<8x32xbf16>
    %c0_1 = arith.constant 0 : index
    %c0_2 = arith.constant 0 : index
    %1 = vector.load %arg2[%c0_1, %c0_2] : memref<512x32xbf16, #tpu.memory_space<vmem>>, vector<512x32xbf16>
    %cst = arith.constant dense<0.000000e+00> : vector<8x512xf32>
    %2 = tpu.matmul %0, %1, %cst {dimension_numbers = #tpu.dot_dimension_numbers<[1], [1], [0], [0], [0, 0, 1, 0], [], []>} : vector<8x32xbf16>, vector<512x32xbf16>, vector<8x512xf32> -> vector<8x512xf32>
    %c0_3 = arith.constant 0 : index
    %c0_4 = arith.constant 0 : index
    %3 = vector.load %arg3[%c0_3, %c0_4] : memref<8x512xf32, #tpu.memory_space<vmem>>, vector<8x512xf32>
    tpu.vector_store %arg3[%c0_3, %c0_4], %2 {strides = array<i32>} : memref<8x512xf32, #tpu.memory_space<vmem>>, vector<8x512xf32>,
    return
  }
  func.func @transform_0(%arg0: i32) -> (i32, i32) {
    %c0_i32 = arith.constant 0 : i32
    %c0_i32_0 = arith.constant 0 : i32
    %c0_i32_1 = arith.constant 0 : i32
    return %c0_i32, %c0_i32_0 : i32, i32
  }
  func.func @transform_1(%arg0: i32) -> (i32, i32) {
    %c0_i32 = arith.constant 0 : i32
    %c0_i32_0 = arith.constant 0 : i32
    return %arg0, %c0_i32 : i32, i32
  }
  func.func @transform_2(%arg0: i32) -> (i32, i32) {
    %c0_i32 = arith.constant 0 : i32
    %c0_i32_0 = arith.constant 0 : i32
    return %c0_i32, %arg0 : i32, i32
  }
}

</mosaic_0001>

<llo_original>
// kernel: tpu_custom_call.1
$region0: #{tpu_custom_call.1}
  #allocation0 [shape = 'u32[]', space=smem, size = 0x4, offset = 0x4, fixed_abs, tag = 'smem constant byte address 0x4 - core index']
  #allocation1 [shape = 'u32[144,128]{1,0:T(1,128)}', space=vmem, size = 0x12000, scoped, tag = 'internal scratch']
  %s0 = inlined_call_operand.vmem [shape: bf16[8,32], index: 0, kind: input, shape index: {}]
  %s1 = inlined_call_operand.vmem [shape: bf16[1024,32], index: 1, kind: input, shape index: {}]
  %s2 = inlined_call_operand.hbm [shape: f32[8,1024], index: 2, kind: output, shape index: {}]
  %s3 = sld [smem:[#allocation0]]
  $region41: #{tpu_custom_call.1} parent=0
    _
  %s5 = ssub.s32 1, %s3
  %s6 = scalar_select 0, %s5, %s3
  $region1: #{tpu_custom_call.1} parent=0
    #allocation2 [shape = 'u8[32768]{0}', space=vmem, size = 0x8000, scoped, tag = 'output window, operand 0']
    #allocation3 [shape = 's32[2]{0}', space=sflag, size = 0x8, scoped, tag = 'scoped memory for tpu_custom_call.1']
    %7 = vsyncpa [#allocation3], 0
    %s8 = scalar_lea.sflag [#allocation3], 1
    %9 = vsyncpa %s8, 0
    loop: start=0, step=1, limit=4
    $region2: #{tpu_custom_call.1} parent=1 // loop_pre_header
      _
    $region3: #{tpu_custom_call.1} parent=1 // loop_header
      %s11 = sphi 0, %s15
      %p12 = scmp.ge.s32.totalorder %s11, 4
      %s19 = sphi 0, %s19
      %s21 = sphi 0, %s19
      %s22 = sphi 0, %s21
      %s36 = sphi 0, %s22
      %s42 = sphi 0, %s44
      %s45 = sphi 0, %s42
      %s46 = sphi 0, %s45
      %s62 = sphi 0, %s46
      %s68 = sphi 0, %s70
      %s71 = sphi 0, %s68
      %s72 = sphi 0, %s71
      %s88 = sphi 0, %s72
    $region4: #{tpu_custom_call.1} parent=1 // loop_header_branch
      %14 = sbr.rel (%p12) target = $region8
    $region5: #{tpu_custom_call.1} parent=1 // loop_body
      %s16 = ssub.s32 %s11, 1
      %s17 = ssub.s32 %s11, 2
      %s18 = sadd.s32 %s11, 1
      %s20 = sadd.s32 %s19, 1
      %p23 = scmp.eq.s32.totalorder %s11, 1
      %p24 = scmp.ne.s32.totalorder %s19, %s21
      %p25 = scmp.eq.s32.totalorder %s11, 0
      %p26 = por %p24, %p25
      %p27 = scmp.ne.s32.totalorder %s19, %s21
      %p28 = scmp.eq.s32.totalorder %s16, 1
      %p29 = por %p27, %p28
      %p30 = scmp.ne.s32.totalorder %s21, %s22
      %p31 = scmp.eq.s32.totalorder %s16, 0
      %p32 = por %p30, %p31
      %p33 = scmp.ne.s32.totalorder %s21, %s22
      %p34 = scmp.eq.s32.totalorder %s17, 1
      %p35 = por %p33, %p34
      %p37 = scmp.ne.s32.totalorder %s22, %s36
      %p38 = scmp.eq.s32.totalorder %s17, 0
      %p39 = por %p37, %p38
      %s40 = ssub.s32 %s11, %s18
      %p41 = scmp.eq.s32.totalorder %s40, 0
      %s43 = sadd.s32 %s42, 1
      %s44 = scalar_select %p41, %s42, %s43
      %p47 = pneg %p41
      %p48 = scmp.eq.s32.totalorder %s11, 1
      %p49 = por %p47, %p48
      %p50 = scmp.ne.s32.totalorder %s42, %s45
      %p51 = scmp.eq.s32.totalorder %s11, 0
      %p52 = por %p50, %p51
      %p53 = scmp.ne.s32.totalorder %s42, %s45
      %p54 = scmp.eq.s32.totalorder %s16, 1
      %p55 = por %p53, %p54
      %p56 = scmp.ne.s32.totalorder %s45, %s46
      %p57 = scmp.eq.s32.totalorder %s16, 0
      %p58 = por %p56, %p57
      %p59 = scmp.ne.s32.totalorder %s45, %s46
      %p60 = scmp.eq.s32.totalorder %s17, 1
      %p61 = por %p59, %p60
      %p63 = scmp.ne.s32.totalorder %s46, %s62
      %p64 = scmp.eq.s32.totalorder %s17, 0
      %p65 = por %p63, %p64
      %s66 = ssub.s32 %s11, %s18
      %p67 = scmp.eq.s32.totalorder %s66, 0
      %s69 = sadd.s32 %s68, 1
      %s70 = scalar_select %p67, %s68, %s69
      %p73 = pneg %p67
      %p74 = scmp.eq.s32.totalorder %s11, 1
      %p75 = por %p73, %p74
      %p76 = scmp.ne.s32.totalorder %s68, %s71
      %p77 = scmp.eq.s32.totalorder %s11, 0
      %p78 = por %p76, %p77
      %p79 = scmp.ne.s32.totalorder %s68, %s71
      %p80 = scmp.eq.s32.totalorder %s16, 1
      %p81 = por %p79, %p80
      %p82 = scmp.ne.s32.totalorder %s71, %s72
      %p83 = scmp.eq.s32.totalorder %s16, 0
      %p84 = por %p82, %p83
      %p85 = scmp.ne.s32.totalorder %s71, %s72
      %p86 = scmp.eq.s32.totalorder %s17, 1
      %p87 = por %p85, %p86
      %p89 = scmp.ne.s32.totalorder %s72, %s88
      %p90 = scmp.eq.s32.totalorder %s17, 0
      %p91 = por %p89, %p90
      %p92 = scmp.le.s32.totalorder 1, %s11
      %p93 = scmp.lt.s32.totalorder %s11, 3
      %p94 = pnand %p92, %p93
      %p95 = pneg %p94
      // Predicated region
      $region9: #{tpu_custom_call.1} parent=5 // pred_check
        _
      $region10: #{tpu_custom_call.1} parent=5 // pred_check_branch
        %97 = sbr.rel (%p94) target = $region12
      $region11: #{tpu_custom_call.1} parent=5 // pred_region
        %s98 = ssub.s32 %s11, 1
        // Predicated region
        $region13: #{tpu_custom_call.1} parent=11 // pred_check
          %p99 = pneg %p32
        $region14: #{tpu_custom_call.1} parent=11 // pred_check_branch
          %101 = sbr.rel (%p99) target = $region16
        $region15: #{tpu_custom_call.1} parent=11 // pred_region
          _
        $region16: #{tpu_custom_call.1} parent=11 // pred_fallthru
          _
      $region12: #{tpu_custom_call.1} parent=5 // pred_fallthru
        _
      %p102 = scmp.lt.s32.totalorder %s11, 2
      // Predicated region
      $region17: #{tpu_custom_call.1} parent=5 // pred_check
        %p103 = pneg %p102
      $region18: #{tpu_custom_call.1} parent=5 // pred_check_branch
        %105 = sbr.rel (%p103) target = $region20
      $region19: #{tpu_custom_call.1} parent=5 // pred_region
        // Predicated region
        $region21: #{tpu_custom_call.1} parent=19 // pred_check
          %p106 = pneg %p52
        $region22: #{tpu_custom_call.1} parent=19 // pred_check_branch
          %108 = sbr.rel (%p106) target = $region24
        $region23: #{tpu_custom_call.1} parent=19 // pred_region
          %s109 = smul.u32 64, %s11
          %p110 = scmp.lt.s32.totalorder %s109, 127
          %s111 = scalar_select %p110, %s109, 127
          %s112 = smul.addr %s111, 4
          %s113 = scalar_lea.vmem %s1, %s112
          %s114 = smul.u32 64, %s11
        $region24: #{tpu_custom_call.1} parent=19 // pred_fallthru
          _
      $region20: #{tpu_custom_call.1} parent=5 // pred_fallthru
        _
      %p115 = scmp.le.s32.totalorder 1, %s11
      %p116 = scmp.lt.s32.totalorder %s11, 3
      %p117 = pnand %p115, %p116
      %p118 = pneg %p117
      // Predicated region
      $region25: #{tpu_custom_call.1} parent=5 // pred_check
        _
      $region26: #{tpu_custom_call.1} parent=5 // pred_check_branch
        %120 = sbr.rel (%p117) target = $region28
      $region27: #{tpu_custom_call.1} parent=5 // pred_region
        %s121 = ssub.s32 %s11, 1
        %p122 = pneg %p32
        %p123 = pneg %p29
        %s124 = smul.u32 64, %s16
        %p125 = scmp.lt.s32.totalorder %s124, 127
        %s126 = scalar_select %p125, %s124, 127
        %s127 = smul.addr %s126, 4
        %s128 = scalar_lea.vmem %s1, %s127
        %p129 = pneg %p58
        %p130 = pneg %p55
        %p131 = pneg %p84
        %p132 = pneg %p81
        %s133 = sand.u32 %s71, 1
        %s134 = scalar_lea.sflag [#allocation3], %s133
        %s135 = sand.u32 %s71, 1
        %s136 = smul.addr %s135, 32
        %s137 = scalar_lea.vmem [#allocation2], %s136
        %s138 = smul.u32 64, %s16
        %p139 = scmp.lt.s32.totalorder %s138, 127
        %s140 = scalar_select %p139, %s138, 127
        %s141 = smul.addr %s140, 4
        %s142 = scalar_lea.vmem %s1, %s141
        %s143 = smul.u32 64, %s16
        %s144 = smul.u32 4, %s16
        %v146 = vld [vmem:[%s0] sm:$0xf]
        %v147 = vld [vmem:[%s142] sm:$0xf]
        %v148 = vld [vmem:[%s142 + $0x4] sm:$0xf]
        %v149 = vld [vmem:[%s142 + $0x8] sm:$0xf]
        %v150 = vld [vmem:[%s142 + $0xc] sm:$0xf]
        %v151 = vld [vmem:[%s142 + $0x10] sm:$0xf]
        %v152 = vld [vmem:[%s142 + $0x14] sm:$0xf]
        %v153 = vld [vmem:[%s142 + $0x18] sm:$0xf]
        %v154 = vld [vmem:[%s142 + $0x1c] sm:$0xf]
        %v155 = vld [vmem:[%s142 + $0x20] sm:$0xf]
        %v156 = vld [vmem:[%s142 + $0x24] sm:$0xf]
        %v157 = vld [vmem:[%s142 + $0x28] sm:$0xf]
        %v158 = vld [vmem:[%s142 + $0x2c] sm:$0xf]
        %v159 = vld [vmem:[%s142 + $0x30] sm:$0xf]
        %v160 = vld [vmem:[%s142 + $0x34] sm:$0xf]
        %v161 = vld [vmem:[%s142 + $0x38] sm:$0xf]
        %v162 = vld [vmem:[%s142 + $0x3c] sm:$0xf]
        %v163 = vld [vmem:[%s142 + $0x40] sm:$0xf]
        %v164 = vld [vmem:[%s142 + $0x44] sm:$0xf]
        %v165 = vld [vmem:[%s142 + $0x48] sm:$0xf]
        %v166 = vld [vmem:[%s142 + $0x4c] sm:$0xf]
        %v167 = vld [vmem:[%s142 + $0x50] sm:$0xf]
        %v168 = vld [vmem:[%s142 + $0x54] sm:$0xf]
        %v169 = vld [vmem:[%s142 + $0x58] sm:$0xf]
        %v170 = vld [vmem:[%s142 + $0x5c] sm:$0xf]
        %v171 = vld [vmem:[%s142 + $0x60] sm:$0xf]
        %v172 = vld [vmem:[%s142 + $0x64] sm:$0xf]
        %v173 = vld [vmem:[%s142 + $0x68] sm:$0xf]
        %v174 = vld [vmem:[%s142 + $0x6c] sm:$0xf]
        %v175 = vld [vmem:[%s142 + $0x70] sm:$0xf]
        %v176 = vld [vmem:[%s142 + $0x74] sm:$0xf]
        %v177 = vld [vmem:[%s142 + $0x78] sm:$0xf]
        %v178 = vld [vmem:[%s142 + $0x7c] sm:$0xf]
        %v179 = vld [vmem:[%s142 + $0x80] sm:$0xf]
        %v180 = vld [vmem:[%s142 + $0x84] sm:$0xf]
        %v181 = vld [vmem:[%s142 + $0x88] sm:$0xf]
        %v182 = vld [vmem:[%s142 + $0x8c] sm:$0xf]
        %v183 = vld [vmem:[%s142 + $0x90] sm:$0xf]
        %v184 = vld [vmem:[%s142 + $0x94] sm:$0xf]
        %v185 = vld [vmem:[%s142 + $0x98] sm:$0xf]
        %v186 = vld [vmem:[%s142 + $0x9c] sm:$0xf]
        %v187 = vld [vmem:[%s142 + $0xa0] sm:$0xf]
        %v188 = vld [vmem:[%s142 + $0xa4] sm:$0xf]
        %v189 = vld [vmem:[%s142 + $0xa8] sm:$0xf]
        %v190 = vld [vmem:[%s142 + $0xac] sm:$0xf]
        %v191 = vld [vmem:[%s142 + $0xb0] sm:$0xf]
        %v192 = vld [vmem:[%s142 + $0xb4] sm:$0xf]
        %v193 = vld [vmem:[%s142 + $0xb8] sm:$0xf]
        %v194 = vld [vmem:[%s142 + $0xbc] sm:$0xf]
        %v195 = vld [vmem:[%s142 + $0xc0] sm:$0xf]
        %v196 = vld [vmem:[%s142 + $0xc4] sm:$0xf]
        %v197 = vld [vmem:[%s142 + $0xc8] sm:$0xf]
        %v198 = vld [vmem:[%s142 + $0xcc] sm:$0xf]
        %v199 = vld [vmem:[%s142 + $0xd0] sm:$0xf]
        %v200 = vld [vmem:[%s142 + $0xd4] sm:$0xf]
        %v201 = vld [vmem:[%s142 + $0xd8] sm:$0xf]
        %v202 = vld [vmem:[%s142 + $0xdc] sm:$0xf]
        %v203 = vld [vmem:[%s142 + $0xe0] sm:$0xf]
        %v204 = vld [vmem:[%s142 + $0xe4] sm:$0xf]
        %v205 = vld [vmem:[%s142 + $0xe8] sm:$0xf]
        %v206 = vld [vmem:[%s142 + $0xec] sm:$0xf]
        %v207 = vld [vmem:[%s142 + $0xf0] sm:$0xf]
        %v208 = vld [vmem:[%s142 + $0xf4] sm:$0xf]
        %v209 = vld [vmem:[%s142 + $0xf8] sm:$0xf]
        %v210 = vld [vmem:[%s142 + $0xfc] sm:$0xf]
        %v275 = vunpack.c.l.b16 %v147
        %v276 = vunpack.c.l.b16 %v148
        %v277 = vunpack.c.l.b16 %v149
        %v278 = vunpack.c.l.b16 %v150
        %v279 = vunpack.c.l.b16 %v151
        %v280 = vunpack.c.l.b16 %v152
        %v281 = vunpack.c.l.b16 %v153
        %v282 = vunpack.c.l.b16 %v154
        %v283 = vunpack.c.l.b16 %v155
        %v284 = vunpack.c.l.b16 %v156
        %v285 = vunpack.c.l.b16 %v157
        %v286 = vunpack.c.l.b16 %v158
        %v287 = vunpack.c.l.b16 %v159
        %v288 = vunpack.c.l.b16 %v160
        %v289 = vunpack.c.l.b16 %v161
        %v290 = vunpack.c.l.b16 %v162
        %v291 = vunpack.c.l.b16 %v163
        %v292 = vunpack.c.l.b16 %v164
        %v293 = vunpack.c.l.b16 %v165
        %v294 = vunpack.c.l.b16 %v166
        %v295 = vunpack.c.l.b16 %v167
        %v296 = vunpack.c.l.b16 %v168
        %v297 = vunpack.c.l.b16 %v169
        %v298 = vunpack.c.l.b16 %v170
        %v299 = vunpack.c.l.b16 %v171
        %v300 = vunpack.c.l.b16 %v172
        %v301 = vunpack.c.l.b16 %v173
        %v302 = vunpack.c.l.b16 %v174
        %v303 = vunpack.c.l.b16 %v175
        %v304 = vunpack.c.l.b16 %v176
        %v305 = vunpack.c.l.b16 %v177
        %v306 = vunpack.c.l.b16 %v178
        %v307 = vunpack.c.l.b16 %v179
        %v308 = vunpack.c.l.b16 %v180
        %v309 = vunpack.c.l.b16 %v181
        %v310 = vunpack.c.l.b16 %v182
        %v311 = vunpack.c.l.b16 %v183
        %v312 = vunpack.c.l.b16 %v184
        %v313 = vunpack.c.l.b16 %v185
        %v314 = vunpack.c.l.b16 %v186
        %v315 = vunpack.c.l.b16 %v187
        %v316 = vunpack.c.l.b16 %v188
        %v317 = vunpack.c.l.b16 %v189
        %v318 = vunpack.c.l.b16 %v190
        %v319 = vunpack.c.l.b16 %v191
        %v320 = vunpack.c.l.b16 %v192
        %v321 = vunpack.c.l.b16 %v193
        %v322 = vunpack.c.l.b16 %v194
        %v323 = vunpack.c.l.b16 %v195
        %v324 = vunpack.c.l.b16 %v196
        %v325 = vunpack.c.l.b16 %v197
        %v326 = vunpack.c.l.b16 %v198
        %v327 = vunpack.c.l.b16 %v199
        %v328 = vunpack.c.l.b16 %v200
        %v329 = vunpack.c.l.b16 %v201
        %v330 = vunpack.c.l.b16 %v202
        %v331 = vunpack.c.l.b16 %v203
        %v332 = vunpack.c.l.b16 %v204
        %v333 = vunpack.c.l.b16 %v205
        %v334 = vunpack.c.l.b16 %v206
        %v335 = vunpack.c.l.b16 %v207
        %v336 = vunpack.c.l.b16 %v208
        %v337 = vunpack.c.l.b16 %v209
        %v338 = vunpack.c.l.b16 %v210
        %v339 = vpack.c.b16 %v276, %v275
        %v340 = vpack.c.b16 %v278, %v277
        %v341 = vpack.c.b16 %v280, %v279
        %v342 = vpack.c.b16 %v282, %v281
        %v343 = vpack.c.b16 %v284, %v283
        %v344 = vpack.c.b16 %v286, %v285
        %v345 = vpack.c.b16 %v288, %v287
        %v346 = vpack.c.b16 %v290, %v289
        %v347 = vpack.c.b16 %v292, %v291
        %v348 = vpack.c.b16 %v294, %v293
        %v349 = vpack.c.b16 %v296, %v295
        %v350 = vpack.c.b16 %v298, %v297
        %v351 = vpack.c.b16 %v300, %v299
        %v352 = vpack.c.b16 %v302, %v301
        %v353 = vpack.c.b16 %v304, %v303
        %v354 = vpack.c.b16 %v306, %v305
        %v355 = vpack.c.b16 %v308, %v307
        %v356 = vpack.c.b16 %v310, %v309
        %v357 = vpack.c.b16 %v312, %v311
        %v358 = vpack.c.b16 %v314, %v313
        %v359 = vpack.c.b16 %v316, %v315
        %v360 = vpack.c.b16 %v318, %v317
        %v361 = vpack.c.b16 %v320, %v319
        %v362 = vpack.c.b16 %v322, %v321
        %v363 = vpack.c.b16 %v324, %v323
        %v364 = vpack.c.b16 %v326, %v325
        %v365 = vpack.c.b16 %v328, %v327
        %v366 = vpack.c.b16 %v330, %v329
        %v367 = vpack.c.b16 %v332, %v331
        %v368 = vpack.c.b16 %v334, %v333
        %v369 = vpack.c.b16 %v336, %v335
        %v370 = vpack.c.b16 %v338, %v337
        %vm371 = vcmask 261120
        %v373 = vsel %vm371, %v146, 0
        %v376 = vsel %vm371, %v339, 0
        %v379 = vsel %vm371, %v340, 0
        %v382 = vsel %vm371, %v341, 0
        %v385 = vsel %vm371, %v342, 0
        %v388 = vsel %vm371, %v343, 0
        %v391 = vsel %vm371, %v344, 0
        %v394 = vsel %vm371, %v345, 0
        %v397 = vsel %vm371, %v346, 0
        %v400 = vsel %vm371, %v347, 0
        %v403 = vsel %vm371, %v348, 0
        %v406 = vsel %vm371, %v349, 0
        %v409 = vsel %vm371, %v350, 0
        %v412 = vsel %vm371, %v351, 0
        %v415 = vsel %vm371, %v352, 0
        %v418 = vsel %vm371, %v353, 0
        %v421 = vsel %vm371, %v354, 0
        %v424 = vsel %vm371, %v355, 0
        %v427 = vsel %vm371, %v356, 0
        %v430 = vsel %vm371, %v357, 0
        %v433 = vsel %vm371, %v358, 0
        %v436 = vsel %vm371, %v359, 0
        %v439 = vsel %vm371, %v360, 0
        %v442 = vsel %vm371, %v361, 0
        %v445 = vsel %vm371, %v362, 0
        %v448 = vsel %vm371, %v363, 0
        %v451 = vsel %vm371, %v364, 0
        %v454 = vsel %vm371, %v365, 0
        %v457 = vsel %vm371, %v366, 0
        %v460 = vsel %vm371, %v367, 0
        %v463 = vsel %vm371, %v368, 0
        %v466 = vsel %vm371, %v369, 0
        %v469 = vsel %vm371, %v370, 0
        %471 = vmatprep.subr.bf16.mxu0 0
        %472 = vmatpush1.bf16.xpose.msra.mxu0 %v397
        %473 = vmatprep.subr.bf16.mxu0 0
        %474 = vmatpush1.bf16.xpose.msra.mxu0 %v394
        %475 = vmatprep.subr.bf16.mxu0 0
        %476 = vmatpush1.bf16.xpose.msra.mxu0 %v391
        %477 = vmatprep.subr.bf16.mxu0 0
        %478 = vmatpush1.bf16.xpose.msra.mxu0 %v388
        %479 = vmatprep.subr.bf16.mxu0 0
        %480 = vmatpush1.bf16.xpose.msra.mxu0 %v385
        %481 = vmatprep.subr.bf16.mxu0 0
        %482 = vmatpush1.bf16.xpose.msra.mxu0 %v382
        %483 = vmatprep.subr.bf16.mxu0 0
        %484 = vmatpush1.bf16.xpose.msra.mxu0 %v379
        %485 = vmatprep.subr.bf16.mxu0 0
        %486 = vmatpush1.bf16.xpose.msra.mxu0 %v376
        %487 = vmatprep.subr.bf16.mxu0 0
        %488 = vmatpush2.bf16.xpose.msra.mxu0 %v421
        %489 = vmatprep.subr.bf16.mxu0 0
        %490 = vmatpush2.bf16.xpose.msra.mxu0 %v418
        %491 = vmatprep.subr.bf16.mxu0 0
        %492 = vmatpush2.bf16.xpose.msra.mxu0 %v415
        %493 = vmatprep.subr.bf16.mxu0 0
        %494 = vmatpush2.bf16.xpose.msra.mxu0 %v412
        %495 = vmatprep.subr.bf16.mxu0 0
        %496 = vmatpush2.bf16.xpose.msra.mxu0 %v409
        %497 = vmatprep.subr.bf16.mxu0 0
        %498 = vmatpush2.bf16.xpose.msra.mxu0 %v406
        %499 = vmatprep.subr.bf16.mxu0 0
        %500 = vmatpush2.bf16.xpose.msra.mxu0 %v403
        %501 = vmatprep.subr.bf16.mxu0 0
        %502 = vmatpush2.bf16.xpose.msra.mxu0 %v400
        %503 = vmatprep.mubr.bf16.mxu0 0
        %504 = vmatmul.mubr.bf16.gmra.mxu0 %v373
        %v505 = vpop.f32.mrf.mxu0
        %v506 = vadd.f32 0.0, %v505
        %v507 = vpop.f32.mrf.mxu0
        %v508 = vadd.f32 0.0, %v507
        %v509 = vpop.f32.mrf.mxu0
        %v510 = vpop.f32.mrf.mxu0
        %511 = vdwg.mxu0
        %512 = vmatprep.subr.bf16.mxu0 0
        %513 = vmatpush1.bf16.xpose.msra.mxu0 %v445
        %514 = vmatprep.subr.bf16.mxu0 0
        %515 = vmatpush1.bf16.xpose.msra.mxu0 %v442
        %516 = vmatprep.subr.bf16.mxu0 0
        %517 = vmatpush1.bf16.xpose.msra.mxu0 %v439
        %518 = vmatprep.subr.bf16.mxu0 0
        %519 = vmatpush1.bf16.xpose.msra.mxu0 %v436
        %520 = vmatprep.subr.bf16.mxu0 0
        %521 = vmatpush1.bf16.xpose.msra.mxu0 %v433
        %522 = vmatprep.subr.bf16.mxu0 0
        %523 = vmatpush1.bf16.xpose.msra.mxu0 %v430
        %524 = vmatprep.subr.bf16.mxu0 0
        %525 = vmatpush1.bf16.xpose.msra.mxu0 %v427
        %526 = vmatprep.subr.bf16.mxu0 0
        %527 = vmatpush1.bf16.xpose.msra.mxu0 %v424
        %528 = vmatprep.subr.bf16.mxu0 0
        %529 = vmatpush2.bf16.xpose.msra.mxu0 %v469
        %530 = vmatprep.subr.bf16.mxu0 0
        %531 = vmatpush2.bf16.xpose.msra.mxu0 %v466
        %532 = vmatprep.subr.bf16.mxu0 0
        %533 = vmatpush2.bf16.xpose.msra.mxu0 %v463
        %534 = vmatprep.subr.bf16.mxu0 0
        %535 = vmatpush2.bf16.xpose.msra.mxu0 %v460
        %536 = vmatprep.subr.bf16.mxu0 0
        %537 = vmatpush2.bf16.xpose.msra.mxu0 %v457
        %538 = vmatprep.subr.bf16.mxu0 0
        %539 = vmatpush2.bf16.xpose.msra.mxu0 %v454
        %540 = vmatprep.subr.bf16.mxu0 0
        %541 = vmatpush2.bf16.xpose.msra.mxu0 %v451
        %542 = vmatprep.subr.bf16.mxu0 0
        %543 = vmatpush2.bf16.xpose.msra.mxu0 %v448
        %544 = vmatprep.mubr.bf16.mxu0 0
        %545 = vmatmul.mubr.bf16.gmra.mxu0 %v373
        %v546 = vpop.f32.mrf.mxu0
        %v547 = vadd.f32 0.0, %v546
        %v548 = vpop.f32.mrf.mxu0
        %v549 = vadd.f32 0.0, %v548
        %v550 = vpop.f32.mrf.mxu0
        %v551 = vpop.f32.mrf.mxu0
        %552 = vdwg.mxu0
        %553 = vst [vmem:[%s137] sm:$0xff] %v506
        %554 = vst [vmem:[%s137 + $0x8] sm:$0xff] %v508
        %555 = vst [vmem:[%s137 + $0x10] sm:$0xff] %v547
        %556 = vst [vmem:[%s137 + $0x18] sm:$0xff] %v549
        %s557 = sand.u32 %s71, 1
        %s558 = scalar_lea.sflag [#allocation3], %s557
        %s559 = sand.u32 %s71, 1
        %s560 = smul.addr %s559, 32
        %s561 = scalar_lea.vmem [#allocation2], %s560
        // Predicated region
        $region29: #{tpu_custom_call.1} parent=27 // pred_check
          %p562 = pneg %p81
        $region30: #{tpu_custom_call.1} parent=27 // pred_check_branch
          %564 = sbr.rel (%p562) target = $region32
        $region31: #{tpu_custom_call.1} parent=27 // pred_region
          %s565 = smul.u32 4, %s16
          %s567 = ssub.s32 512, 512
          %568 = vsyncadd %s558, %s567
          %s569 = smul.addr %s565, 128
          %s570 = scalar_lea.hbm %s2, %s569
          %s572 = sshll.u32 %s561, 4
          %s573 = int_to_ptr.vmem [resolvable:$true] %s572
          %575 = dma.vmem_to_hbm [thread:$0]  %s573, 512, %s570, %s558
        $region32: #{tpu_custom_call.1} parent=27 // pred_fallthru
          _
      $region28: #{tpu_custom_call.1} parent=5 // pred_fallthru
        _
      %p576 = scmp.le.s32.totalorder 2, %s11
      // Predicated region
      $region33: #{tpu_custom_call.1} parent=5 // pred_check
        %p577 = pneg %p576
      $region34: #{tpu_custom_call.1} parent=5 // pred_check_branch
        %579 = sbr.rel (%p577) target = $region36
      $region35: #{tpu_custom_call.1} parent=5 // pred_region
        %s580 = ssub.s32 %s11, 2
        // Predicated region
        $region37: #{tpu_custom_call.1} parent=35 // pred_check
          %p581 = pneg %p87
        $region38: #{tpu_custom_call.1} parent=35 // pred_check_branch
          %583 = sbr.rel (%p581) target = $region40
        $region39: #{tpu_custom_call.1} parent=35 // pred_region
          %s584 = sand.u32 %s72, 1
          %s585 = scalar_lea.sflag [#allocation3], %s584
          %s586 = sand.u32 %s72, 1
          %s587 = smul.addr %s586, 32
          %s588 = scalar_lea.vmem [#allocation2], %s587
          %589 = dma.done %s585, 512
        $region40: #{tpu_custom_call.1} parent=35 // pred_fallthru
          _
      $region36: #{tpu_custom_call.1} parent=5 // pred_fallthru
        _
    $region6: #{tpu_custom_call.1} parent=1 // loop_footer
      %s15 = sadd.s32 1, %s11
    $region7: #{tpu_custom_call.1} parent=1 // loop_footer_branch
      %10 = sbr.rel target = $region3
    $region8: #{tpu_custom_call.1} parent=1 // loop_exit
      _
    %590 = vsyncpa [#allocation3], 1
    %s591 = scalar_lea.sflag [#allocation3], 1
    %592 = vsyncpa %s591, 1

</llo_original>
